<compile_context>
chip_gen: v7x
topology: tpu7x:2x2x1
jax: 0.10.0
libtpu: 0.0.40
codegen_flags: <defaults>
</compile_context>

<pallas_src>
import functools

import jax
import jax.numpy as jnp
from jax import lax
from jax.experimental import pallas as pl
from jax.experimental.pallas import tpu as pltpu

RMS_EPS = 1e-5


def _rmsnorm(x, w):
    # x: (S, D) f32, w: (1, D) f32
    var = jnp.mean(x * x, axis=-1, keepdims=True)
    return x * lax.rsqrt(var + RMS_EPS) * w


# ----------------------------------------------------------------------------
# Kernel 1: column sum of the (V, D) embedding, tiled over the vocab axis.
# bf16 tiles are fed straight to the MXU (ones-vector dot, f32 accumulation);
# no per-tile f32 upcast.
# ----------------------------------------------------------------------------
def emb_colsum_kernel(emb_ref, o_ref):
    @pl.when(pl.program_id(0) == 0)
    def _init():
        o_ref[...] = jnp.zeros_like(o_ref)

    t_v = emb_ref.shape[0]
    ones = jnp.ones((1, t_v), dtype=emb_ref.dtype)
    o_ref[...] += jnp.dot(ones, emb_ref[...], preferred_element_type=jnp.float32)


def emb_colsum(emb):
    V, D = emb.shape
    t_v = V
    for cand in (512, 256, 128, 64, 32, 16, 8):   # 512/256 keep v5e VMEM happy
        if V % cand == 0:
            t_v = cand
            break
    itemsize = jnp.dtype(emb.dtype).itemsize
    vmem = int(min(100 << 20, max(8 << 20, 2 * t_v * D * itemsize + 2 * D * 4 + (4 << 20))))
    return pl.pallas_call(
        emb_colsum_kernel,
        out_shape=jax.ShapeDtypeStruct((1, D), jnp.float32),
        grid_spec=pltpu.PrefetchScalarGridSpec(
            num_scalar_prefetch=0,
            grid=(V // t_v,),
            in_specs=[pl.BlockSpec((t_v, D), lambda v: (v, 0))],
            out_specs=pl.BlockSpec((1, D), lambda v: (0, 0))),
        compiler_params=pltpu.CompilerParams(
            dimension_semantics=("arbitrary",),
            vmem_limit_bytes=vmem),
    )(emb)


# ----------------------------------------------------------------------------
# Kernel 2: fused decoder layer. grid = (batch, F-tiles).
# ----------------------------------------------------------------------------
def im_decoder_layer_kernel(
    h_ref, ln1_ref, ln2_ref,
    wqt_ref, wkt_ref, wvt_ref, wo_ref,
    w_gu_ref, w_dn_ref,
    o_ref,
    xmid_ref, h2b_ref, acc_ref,
    *, num_heads, ff_tile):
    f = pl.program_id(1)

    # ------- attention sub-layer + post-norm: once per batch row (f == 0) -------
    @pl.when(f == 0)
    def _attn_and_prep():
        x = h_ref[0].astype(jnp.float32)                     # (S, D) residual, f32
        S, D = x.shape
        H = num_heads
        hd = D // H

        h1b = _rmsnorm(x, ln1_ref[...].astype(jnp.float32)).astype(jnp.bfloat16)

        # (D_out, D_in) vs (S, D_in) via contraction dims -- no .T materialization.
        # 1/sqrt(hd) is pre-folded into wqt by the wrapper.
        def proj(w_ref):
            r = lax.dot_general(w_ref[...], h1b, (((1,), (1,)), ((), ())),
                                preferred_element_type=jnp.float32)
            return r.astype(jnp.bfloat16)                    # (D_out, S) bf16

        q3 = proj(wqt_ref).reshape(H, hd, S)                 # head-major, free reshape
        k3 = proj(wkt_ref).reshape(H, hd, S)
        v3 = proj(wvt_ref).reshape(H, hd, S)

        # scores: contract head_dim of q against head_dim of k, batched over heads.
        s = lax.dot_general(q3, k3, (((1,), (1,)), ((0,), (0,))),
                            preferred_element_type=jnp.float32)   # (H, Sq, Sk)

        row = lax.broadcasted_iota(jnp.int32, (S, S), 0)
        col = lax.broadcasted_iota(jnp.int32, (S, S), 1)
        s = jnp.where((col <= row)[None, :, :], s, -1e30)
        m = jnp.max(s, axis=-1, keepdims=True)
        p = jnp.exp(s - m)                                    # unnormalized probs
        l = jnp.sum(p, axis=-1)                               # (H, Sq) f32

        # PV with unnormalized p; normalize the (H, hd, Sq) result instead of the
        # (H, Sq, Sk) probabilities (S/hd fewer VPU multiplies).
        o_t = lax.dot_general(v3, p.astype(jnp.bfloat16),
                              (((2,), (2,)), ((0,), (0,))),
                              preferred_element_type=jnp.float32)  # (H, hd, Sq)
        o_t = o_t * pl.reciprocal(l, approx=True)[:, None, :]

        # collapse heads to (D, Sq) for free; contract axis 0 against wo axis 0.
        attn_t = o_t.reshape(D, S).astype(jnp.bfloat16)
        x = x + lax.dot_general(attn_t, wo_ref[...], (((0,), (0,)), ((), ())),
                                preferred_element_type=jnp.float32)

        xmid_ref[...] = x                                     # residual after attention
        h2b_ref[...] = _rmsnorm(x, ln2_ref[...].astype(jnp.float32)).astype(jnp.bfloat16)
        acc_ref[...] = jnp.zeros_like(acc_ref)                # MLP f32 accumulator

    # ------- SwiGLU MLP: one F-tile per grid step (gate+up fused) -------
    gu = jnp.dot(h2b_ref[...], w_gu_ref[0], preferred_element_type=jnp.float32)  # (S, 2*tf)
    g = gu[:, :ff_tile]
    u = gu[:, ff_tile:]
    act = (g * jax.nn.sigmoid(g) * u).astype(jnp.bfloat16)
    acc_ref[...] += jnp.dot(act, w_dn_ref[0], preferred_element_type=jnp.float32)

    @pl.when(f == pl.num_programs(1) - 1)
    def _finalize():
        o_ref[0] = (xmid_ref[...] + acc_ref[...]).astype(o_ref.dtype)


# ----------------------------------------------------------------------------
# Wrapper
# ----------------------------------------------------------------------------
def im_decoder_layer(hidden, params, allowed_ids, block_strength, *, num_heads):
    """Returns (hidden_states,) like the PyTorch module (mask assumed non-empty)."""
    B, S, D = hidden.shape
    V = params["vspace_to_emb"].shape[0]
    F = params["w_gate"].shape[-1]
    H = num_heads
    hd = D // H

    # ---- vocab-mask delta: algebraic gather form (no dense (1,V)@(V,D) matvec) ----
    colsum = emb_colsum(params["vspace_to_emb"])[0]                       # (D,) f32
    allowed_rows = jnp.take(params["vspace_to_emb"], allowed_ids, axis=0)  # (n_a, D)
    allowed_sum = jnp.sum(allowed_rows.astype(jnp.float32), axis=0)        # (D,) f32
    n_a = int(allowed_ids.shape[0])
    n_d = V - n_a
    inv_a = 1.0 / max(n_a, 1)
    inv_d = 1.0 / max(n_d, 1)
    delta = jnp.asarray(block_strength, jnp.float32) * (
        (inv_a + inv_d) * allowed_sum - inv_d * colsum)                    # (D,) f32

    # ---- one-time weight layout prep (outside the kernel) ----
    scale = 1.0 / (hd ** 0.5)
    wq_t = (params["wq"].astype(jnp.float32).T * scale).astype(jnp.bfloat16)  # scale folded in
    wk_t = jnp.transpose(params["wk"])
    wv_t = jnp.transpose(params["wv"])

    # F-tiling for the MLP weights; gate/up fused per tile: [gate_tile | up_tile].
    tf = F
    for cand in (2048, 1792, 1024, 512, 256, 128):
        if F % cand == 0:
            tf = cand
            break
    nf = F // tf
    gate3 = params["w_gate"].reshape(D, nf, tf).transpose(1, 0, 2)         # (nf, D, tf)
    up3 = params["w_up"].reshape(D, nf, tf).transpose(1, 0, 2)             # (nf, D, tf)
    w_gu = jnp.concatenate([gate3, up3], axis=-1)                          # (nf, D, 2*tf)
    w_dn = params["w_down"].reshape(nf, tf, D)                             # (nf, tf, D)

    kernel = functools.partial(im_decoder_layer_kernel, num_heads=H, ff_tile=tf)

    bf2 = jnp.dtype(jnp.bfloat16).itemsize
    est = (2 * 4 * D * D * bf2                      # wq/wk/wv/wo (worst-case 2-buffered)
           + 4 * D * 4                              # ln1/ln2
           + 2 * (D * 2 * tf + tf * D) * bf2        # gate|up + down tiles (2-buffered)
           + 2 * 2 * S * D * 4                      # hidden + out blocks (2-buffered)
           + 2 * S * D * 4 + S * D * bf2            # scratch: xmid, acc, h2b
           + 2 * H * S * S * 4                      # scores + probs
           + 4 * D * S * 4)                         # q/k/v/attn transients
    vmem = int(min(100 << 20, max(16 << 20, est + (4 << 20))))

    def _call(single_buffer_consts):
        cmode = {"pipeline_mode": pl.Buffered(1)} if single_buffer_consts else {}

        def const(shape):
            # batch-invariant streams: single-buffer so resident weight VMEM isn't doubled
            return pl.BlockSpec(shape, lambda b, f: (0, 0), **cmode)

        grid_spec = pltpu.PrefetchScalarGridSpec(
            num_scalar_prefetch=0,
            grid=(B, nf),
            in_specs=[
                pl.BlockSpec((1, S, D), lambda b, f: (b, 0, 0)),          # hidden
                const((1, D)), const((1, D)),                             # ln1, ln2
                const((D, D)), const((D, D)), const((D, D)),              # wq^T, wk^T, wv^T
                const((D, D)),                                            # wo
                pl.BlockSpec((1, D, 2 * tf), lambda b, f: (f, 0, 0)),     # [gate|up] tile
                pl.BlockSpec((1, tf, D), lambda b, f: (f, 0, 0)),         # down tile
            ],
            out_specs=pl.BlockSpec((1, S, D), lambda b, f: (b, 0, 0)),
            scratch_shapes=[pltpu.VMEM((S, D), jnp.float32),    # residual after attention
                            pltpu.VMEM((S, D), jnp.bfloat16),   # post-norm activations
                            pltpu.VMEM((S, D), jnp.float32)],   # MLP accumulator
        )
        return pl.pallas_call(
            kernel,
            out_shape=jax.ShapeDtypeStruct((B, S, D), hidden.dtype),
            grid_spec=grid_spec,
            compiler_params=pltpu.CompilerParams(
                dimension_semantics=("parallel", "arbitrary"),  # batch rows independent
                vmem_limit_bytes=vmem),
        )(hidden, params["ln1"], params["ln2"],
          wq_t, wk_t, wv_t, params["wo"], w_gu, w_dn)

    try:
        out = _call(True)
    except Exception:   # pragma: no cover — jax build without Buffered(1) support
        out = _call(False)

    # Vocab-mask injection on (last batch, last token), applied outside the kernel so
    # the colsum pallas_call and the decoder kernel have no serializing dependency.
    out = out.at[-1, -1, :].add(delta.astype(out.dtype))
    return (out,)


# ----------------------------------------------------------------------------
# Pure-JAX reference (same bf16 weights, f32 math) for correctness checking.
# ----------------------------------------------------------------------------
def reference(hidden, params, mask_vec, block_strength, *, num_heads):
    f32 = lambda a: a.astype(jnp.float32)
    x = f32(hidden)
    B, S, D = x.shape
    hd = D // num_heads

    def rms(y, w):
        var = jnp.mean(y * y, axis=-1, keepdims=True)
        return y * lax.rsqrt(var + RMS_EPS) * w

    h1 = rms(x, f32(params["ln1"]))
    q = (h1 @ f32(params["wq"])).reshape(B, S, num_heads, hd).transpose(0, 2, 1, 3)
    k = (h1 @ f32(params["wk"])).reshape(B, S, num_heads, hd).transpose(0, 2, 1, 3)
    v = (h1 @ f32(params["wv"])).reshape(B, S, num_heads, hd).transpose(0, 2, 1, 3)
    s = jnp.einsum("bhqd,bhkd->bhqk", q, k) / (hd ** 0.5)
    causal = jnp.tril(jnp.ones((S, S), bool))
    s = jnp.where(causal, s, -1e30)
    p = jax.nn.softmax(s, axis=-1)
    attn = jnp.einsum("bhqk,bhkd->bhqd", p, v).transpose(0, 2, 1, 3).reshape(B, S, D)
    x = x + attn @ f32(params["wo"])

    h2 = rms(x, f32(params["ln2"]))
    g = h2 @ f32(params["w_gate"])
    u = h2 @ f32(params["w_up"])
    x = x + (g * jax.nn.sigmoid(g) * u) @ f32(params["w_down"])

    V = mask_vec.shape[-1]
    n_allowed = jnp.sum(mask_vec)
    n_disallowed = jnp.float32(V) - n_allowed
    inv_a = 1.0 / jnp.maximum(n_allowed, 1.0)
    inv_d = 1.0 / jnp.maximum(n_disallowed, 1.0)
    vstate = jnp.where(mask_vec > 0.5, inv_a, -inv_d)
    delta = (vstate @ f32(params["vspace_to_emb"]))[0] * block_strength
    x = x.at[-1, -1, :].add(delta)
    return x


if __name__ == "__main__":
    B, S, D, H, F, V = 2, 8, 32, 4, 64, 128

    key = jax.random.PRNGKey(0)
    ks = jax.random.split(key, 16)

    def w(k, shape, scale=0.1):
        # weights live in bf16 (MXU-native); accumulation stays f32 in-kernel
        return (jax.random.normal(k, shape, jnp.float32) * scale).astype(jnp.bfloat16)

    params = {
        "ln1": 1.0 + 0.1 * jax.random.normal(ks[0], (1, D), jnp.float32),
        "ln2": 1.0 + 0.1 * jax.random.normal(ks[1], (1, D), jnp.float32),
        "wq": w(ks[2], (D, D)),
        "wk": w(ks[3], (D, D)),
        "wv": w(ks[4], (D, D)),
        "wo": w(ks[5], (D, D)),
        "w_gate": w(ks[6], (D, F)),
        "w_up": w(ks[7], (D, F)),
        "w_down": w(ks[8], (F, D)),
        "vspace_to_emb": w(ks[9], (V, D)),   # tied embedding (vocab, hidden)
    }

    hidden = jax.random.normal(ks[10], (B, S, D), jnp.float32)

    # IMDecoderLayer.mask is a list of allowed token ids.
    allowed_ids = jnp.array([3, 17, 42, 99], dtype=jnp.int32)
    mask_vec = jnp.zeros((1, V), jnp.float32).at[0, allowed_ids].set(1.0)

    # nn.Parameter(torch.tensor(1.0)) per block
    block_strength = jnp.float32(1.0)

    (out,) = im_decoder_layer(hidden, params, allowed_ids, block_strength, num_heads=H)
    out = jax.block_until_ready(out)

    ref = reference(hidden, params, mask_vec, block_strength, num_heads=H)
    assert out.shape == (B, S, D)
    assert bool(jnp.all(jnp.isfinite(out)))
    assert bool(jnp.allclose(out, ref, atol=1e-2, rtol=1e-2)), "mismatch vs reference"

    print("KERNEL_OK")
</pallas_src>

<mosaic_0001>
module attributes {stable_mosaic.version = 11 : i64} {
  func.func @emb_colsum_kernel(%arg0: i32, %arg1: memref<128x32xbf16, #tpu.memory_space<vmem>>, %arg2: memref<1x32xf32, #tpu.memory_space<vmem>>) attributes {dimension_semantics = [#tpu.dimension_semantics<arbitrary>], iteration_bounds = array<i64: 1>, scalar_prefetch = 0 : i64, scratch_operands = 0 : i64, tpu.core_type = #tpu.core_type<tc>, window_params = [{transform_indices = @transform_0, window_bounds = array<i64: 128, 32>}, {pipeline_mode = #tpu.pipeline_mode<synchronous>, transform_indices = @transform_1, window_bounds = array<i64: 1, 32>}]} {
    %c0_i32 = arith.constant 0 : i32
    %0 = arith.cmpi eq, %arg0, %c0_i32 : i32
    %1 = arith.extui %0 : i1 to i32
    %c0_i32_0 = arith.constant 0 : i32
    %2 = arith.cmpi ne, %1, %c0_i32_0 : i32
    scf.if %2 {
      %cst_7 = arith.constant 0.000000e+00 : f32
      %9 = vector.broadcast %cst_7 : f32 to vector<1x32xf32>
      %c0_8 = arith.constant 0 : index
      %c0_9 = arith.constant 0 : index
      %10 = vector.load %arg2[%c0_8, %c0_9] : memref<1x32xf32, #tpu.memory_space<vmem>>, vector<1x32xf32>
      tpu.vector_store %arg2[%c0_8, %c0_9], %9 {strides = array<i32>} : memref<1x32xf32, #tpu.memory_space<vmem>>, vector<1x32xf32>,
    } else {
    }
    %cst = arith.constant 1.000000e+00 : bf16
    %3 = vector.broadcast %cst : bf16 to vector<1x128xbf16>
    %c0 = arith.constant 0 : index
    %c0_1 = arith.constant 0 : index
    %4 = vector.load %arg2[%c0, %c0_1] : memref<1x32xf32, #tpu.memory_space<vmem>>, vector<1x32xf32>
    %c0_2 = arith.constant 0 : index
    %c0_3 = arith.constant 0 : index
    %5 = vector.load %arg1[%c0_2, %c0_3] : memref<128x32xbf16, #tpu.memory_space<vmem>>, vector<128x32xbf16>
    %cst_4 = arith.constant dense<0.000000e+00> : vector<1x32xf32>
    %6 = tpu.matmul %3, %5, %cst_4 {dimension_numbers = #tpu.dot_dimension_numbers<[1], [0], [0], [1], [0, 0, 1, 1], [], []>} : vector<1x128xbf16>, vector<128x32xbf16>, vector<1x32xf32> -> vector<1x32xf32>
    %7 = arith.addf %4, %6 : vector<1x32xf32>
    %c0_5 = arith.constant 0 : index
    %c0_6 = arith.constant 0 : index
    %8 = vector.load %arg2[%c0_5, %c0_6] : memref<1x32xf32, #tpu.memory_space<vmem>>, vector<1x32xf32>
    tpu.vector_store %arg2[%c0_5, %c0_6], %7 {strides = array<i32>} : memref<1x32xf32, #tpu.memory_space<vmem>>, vector<1x32xf32>,
    return
  }
  func.func @transform_0(%arg0: i32) -> (i32, i32) {
    %c0_i32 = arith.constant 0 : i32
    %c0_i32_0 = arith.constant 0 : i32
    return %arg0, %c0_i32 : i32, i32
  }
  func.func @transform_1(%arg0: i32) -> (i32, i32) {
    %c0_i32 = arith.constant 0 : i32
    %c0_i32_0 = arith.constant 0 : i32
    %c0_i32_1 = arith.constant 0 : i32
    return %c0_i32, %c0_i32_0 : i32, i32
  }
}

</mosaic_0001>

<llo_original>
// kernel: tpu_custom_call.1
$region0: #{tpu_custom_call.1}
  #allocation0 [shape = 'u32[]', space=smem, size = 0x4, offset = 0x4, fixed_abs, tag = 'smem constant byte address 0x4 - core index']
  #allocation1 [shape = 'u32[144,128]{1,0:T(1,128)}', space=vmem, size = 0x12000, scoped, tag = 'internal scratch']
  %s0 = inlined_call_operand.vmem [shape: bf16[128,32], index: 0, kind: input, shape index: {}]
  %s1 = inlined_call_operand.hbm [shape: f32[1,32], index: 1, kind: output, shape index: {}]
  %s2 = sld [smem:[#allocation0]]
  $region18: #{tpu_custom_call.1} parent=0
    _
  %s4 = ssub.s32 1, %s2
  %s5 = scalar_select 0, %s4, %s2
  $region1: #{tpu_custom_call.1} parent=0
    #allocation2 [shape = 'u8[512]{0}', space=vmem, size = 0x400, scoped, tag = 'output window, operand 0, single buffered']
    #allocation3 [shape = 's32[1]{0}', space=sflag, size = 0x4, scoped, tag = 'scoped memory for tpu_custom_call.1']
    %6 = vsyncpa [#allocation3], 0
    // Predicated region
    $region2: #{tpu_custom_call.1} parent=1 // pred_check
      _
    $region3: #{tpu_custom_call.1} parent=1 // pred_check_branch
      %8 = sbr.rel (0) target = $region5
    $region4: #{tpu_custom_call.1} parent=1 // pred_region
      _
    $region5: #{tpu_custom_call.1} parent=1 // pred_fallthru
      _
    %p11 = scmp.eq.s32.totalorder 0, 0
    // Predicated region
    $region6: #{tpu_custom_call.1} parent=1 // pred_check
      %p12 = pneg %p11
    $region7: #{tpu_custom_call.1} parent=1 // pred_check_branch
      %14 = sbr.rel (%p12) target = $region9
    $region8: #{tpu_custom_call.1} parent=1 // pred_region
      %vm15 = vcmask 253952
      %16 = vst.msk [vmem:[#allocation2] sm:$0x1] %vm15, 0.0
    $region9: #{tpu_custom_call.1} parent=1 // pred_fallthru
      _
    %v17 = vld [vmem:[#allocation2] sm:$0x1]
    %v18 = vld [vmem:[%s0] sm:$0xf]
    %v19 = vld [vmem:[%s0 + $0x4] sm:$0xf]
    %v20 = vld [vmem:[%s0 + $0x8] sm:$0xf]
    %v21 = vld [vmem:[%s0 + $0xc] sm:$0xf]
    %v22 = vld [vmem:[%s0 + $0x10] sm:$0xf]
    %v23 = vld [vmem:[%s0 + $0x14] sm:$0xf]
    %v24 = vld [vmem:[%s0 + $0x18] sm:$0xf]
    %v25 = vld [vmem:[%s0 + $0x1c] sm:$0xf]
    %v26 = vld [vmem:[%s0 + $0x20] sm:$0xf]
    %v27 = vld [vmem:[%s0 + $0x24] sm:$0xf]
    %v28 = vld [vmem:[%s0 + $0x28] sm:$0xf]
    %v29 = vld [vmem:[%s0 + $0x2c] sm:$0xf]
    %v30 = vld [vmem:[%s0 + $0x30] sm:$0xf]
    %v31 = vld [vmem:[%s0 + $0x34] sm:$0xf]
    %v32 = vld [vmem:[%s0 + $0x38] sm:$0xf]
    %v33 = vld [vmem:[%s0 + $0x3c] sm:$0xf]
    %v50 = vunpack.c.l.b16 %v18
    %v51 = vunpack.c.l.b16 %v19
    %v52 = vunpack.c.l.b16 %v20
    %v53 = vunpack.c.l.b16 %v21
    %v54 = vunpack.c.l.b16 %v22
    %v55 = vunpack.c.l.b16 %v23
    %v56 = vunpack.c.l.b16 %v24
    %v57 = vunpack.c.l.b16 %v25
    %v58 = vunpack.c.l.b16 %v26
    %v59 = vunpack.c.l.b16 %v27
    %v60 = vunpack.c.l.b16 %v28
    %v61 = vunpack.c.l.b16 %v29
    %v62 = vunpack.c.l.b16 %v30
    %v63 = vunpack.c.l.b16 %v31
    %v64 = vunpack.c.l.b16 %v32
    %v65 = vunpack.c.l.b16 %v33
    %v66 = vpack.c.b16 %v51, %v50
    %v67 = vpack.c.b16 %v53, %v52
    %v68 = vpack.c.b16 %v55, %v54
    %v69 = vpack.c.b16 %v57, %v56
    %v70 = vpack.c.b16 %v59, %v58
    %v71 = vpack.c.b16 %v61, %v60
    %v72 = vpack.c.b16 %v63, %v62
    %v73 = vpack.c.b16 %v65, %v64
    %82 = vmatprep.subr.bf16.mxu0 0
    %83 = vmatpush1.bf16.msra.mxu0 %v66
    %84 = vmatprep.subr.bf16.mxu0 0
    %85 = vmatpush1.bf16.msra.mxu0 %v67
    %86 = vmatprep.subr.bf16.mxu0 0
    %87 = vmatpush1.bf16.msra.mxu0 %v68
    %88 = vmatprep.subr.bf16.mxu0 0
    %89 = vmatpush1.bf16.msra.mxu0 %v69
    %90 = vmatprep.subr.bf16.mxu0 0
    %91 = vmatpush1.bf16.msra.mxu0 %v70
    %92 = vmatprep.subr.bf16.mxu0 0
    %93 = vmatpush1.bf16.msra.mxu0 %v71
    %94 = vmatprep.subr.bf16.mxu0 0
    %95 = vmatpush1.bf16.msra.mxu0 %v72
    %96 = vmatprep.subr.bf16.mxu0 0
    %97 = vmatpush1.bf16.msra.mxu0 %v73
    %98 = vmatprep.subr.bf16.mxu0 0
    %99 = vmatpush1.bf16.msra.mxu0 0
    %100 = vmatprep.subr.bf16.mxu0 0
    %101 = vmatpush1.bf16.msra.mxu0 0
    %102 = vmatprep.subr.bf16.mxu0 0
    %103 = vmatpush1.bf16.msra.mxu0 0
    %104 = vmatprep.subr.bf16.mxu0 0
    %105 = vmatpush1.bf16.msra.mxu0 0
    %106 = vmatprep.subr.bf16.mxu0 0
    %107 = vmatpush1.bf16.msra.mxu0 0
    %108 = vmatprep.subr.bf16.mxu0 0
    %109 = vmatpush1.bf16.msra.mxu0 0
    %110 = vmatprep.subr.bf16.mxu0 0
    %111 = vmatpush1.bf16.msra.mxu0 0
    %112 = vmatprep.subr.bf16.mxu0 0
    %113 = vmatpush1.bf16.msra.mxu0 0
    %114 = vmatprep.mubr.bf16.mxu0 0
    %115 = vmatmul.mubr.bf16.gmra.mrb[0].mxu0 1065369472
    %v116 = vpop.f32.mrb[0].mxu0
    %v117 = vadd.f32 0.0, %v116
    %v118 = vpop.f32.mrb[0].mxu0
    %v119 = vpop.f32.mrb[0].mxu0
    %v120 = vpop.f32.mrb[0].mxu0
    %121 = vdwg.mxu0
    %v122 = vadd.f32 %v17, %v117
    %vm123 = vcmask 253952
    %124 = vst.msk [vmem:[#allocation2] sm:$0x1] %vm123, %v122
    // Predicated region
    $region10: #{tpu_custom_call.1} parent=1 // pred_check
      _
    $region11: #{tpu_custom_call.1} parent=1 // pred_check_branch
      %126 = sbr.rel (0) target = $region13
    $region12: #{tpu_custom_call.1} parent=1 // pred_region
      %s128 = ssub.s32 16, 16
      %129 = vsyncadd [#allocation3], %s128
      %s131 = sshll.u32 [#allocation2], 4
      %s132 = int_to_ptr.vmem [resolvable:$true] %s131
      %134 = dma.vmem_to_hbm [thread:$0]  %s132, 16, %s1, [#allocation3]
    $region13: #{tpu_custom_call.1} parent=1 // pred_fallthru
      _
    // Predicated region
    $region14: #{tpu_custom_call.1} parent=1 // pred_check
      _
    $region15: #{tpu_custom_call.1} parent=1 // pred_check_branch
      %136 = sbr.rel (0) target = $region17
    $region16: #{tpu_custom_call.1} parent=1 // pred_region
      %137 = dma.done [#allocation3], 16
    $region17: #{tpu_custom_call.1} parent=1 // pred_fallthru
      _
    %138 = vsyncpa [#allocation3], 1

</llo_original>
